<compile_context>
chip_gen: v6e
topology: v6e:2x2x1
jax: 0.10.0
libtpu: 0.0.40
codegen_flags: <defaults>
</compile_context>

<pallas_src>
import functools

import jax
import jax.numpy as jnp
from jax.experimental import pallas as pl
from jax.experimental.pallas import tpu as pltpu


def _round_up(x, m):
    return -(-x // m) * m


def _next_pow2(x):
    return 1 << (x - 1).bit_length()


# --------------------------------------------------------------------------
# Kernel 1: one SimAM row per sublane row; reduction over the lane axis.
# Used when L (rounded to a multiple of 128) is the lane width.
# --------------------------------------------------------------------------
def _simam_rowwise_kernel(x_ref, o_ref, *, e_lambda, inv_l, inv_n, l):
    # x_ref / o_ref: (TR, L_pad) tiles in VMEM; padded lanes hold zeros.
    x = x_ref[...].astype(jnp.float32)

    # One-pass moments over the lane axis (padding zeros contribute nothing).
    sum_x = jnp.sum(x, axis=-1, keepdims=True)           # (TR, 1)
    sum_x2 = jnp.sum(x * x, axis=-1, keepdims=True)       # (TR, 1)

    mu = sum_x * inv_l                                     # mean over the REAL L
    s = sum_x2 - l * mu * mu                               # sum((x - mu)^2) over real L

    # Per-row reciprocal of the energy denominator, broadcast as a multiply.
    inv_denom = pl.reciprocal(4.0 * (s * inv_n + e_lambda), approx=False)

    d = x - mu
    y = (d * d) * inv_denom + 0.5
    o_ref[...] = (x * jax.nn.sigmoid(y)).astype(o_ref.dtype)


# --------------------------------------------------------------------------
# Kernel 2: small-L path.  Each 128-wide lane row packs `groups` SimAM rows of
# (zero-padded) length `seg`.  Per-segment reductions / broadcasts are done
# with tiny MXU matmuls against a constant 0/1 segment-membership matrix.
# --------------------------------------------------------------------------
def _simam_packed_kernel(x_ref, o_ref, *, e_lambda, inv_l, inv_n, l, seg, groups):
    width = seg * groups                                   # always 128 here
    f32, bf16 = jnp.float32, jnp.bfloat16

    x = x_ref[...].astype(f32)                             # (TR, width)
    xx = x * x

    # Constant 0/1 segment matrices (exact in bf16), built from 2-D iotas.
    r = jax.lax.broadcasted_iota(jnp.int32, (width, groups), 0)
    g = jax.lax.broadcasted_iota(jnp.int32, (width, groups), 1)
    seg_mat = jnp.where((r >= g * seg) & (r < (g + 1) * seg), 1.0, 0.0).astype(bf16)

    gt = jax.lax.broadcasted_iota(jnp.int32, (groups, width), 0)
    rt = jax.lax.broadcasted_iota(jnp.int32, (groups, width), 1)
    spread_mat = jnp.where((rt >= gt * seg) & (rt < (gt + 1) * seg), 1.0, 0.0).astype(bf16)

    def _split(v):
        # f32 value as an exact-ish sum of two bf16 parts (error ~ 2^-18 rel).
        hi = v.astype(bf16)
        lo = (v - hi.astype(f32)).astype(bf16)
        return hi, lo

    def _seg_reduce(v):                                     # (TR, width) -> (TR, G)
        hi, lo = _split(v)
        return (jnp.dot(hi, seg_mat, preferred_element_type=f32)
                + jnp.dot(lo, seg_mat, preferred_element_type=f32))

    def _seg_spread(v):                                     # (TR, G) -> (TR, width)
        hi, lo = _split(v)
        return (jnp.dot(hi, spread_mat, preferred_element_type=f32)
                + jnp.dot(lo, spread_mat, preferred_element_type=f32))

    sum_x = _seg_reduce(x)                                   # (TR, G)
    sum_x2 = _seg_reduce(xx)                                 # (TR, G)
    mu = sum_x * inv_l
    s = sum_x2 - l * (mu * mu)
    inv_denom = pl.reciprocal(4.0 * (s * inv_n + e_lambda), approx=False)

    mu_full = _seg_spread(mu)                                # (TR, width)
    invd_full = _seg_spread(inv_denom)                       # (TR, width)

    d = x - mu_full
    y = (d * d) * invd_full + 0.5
    o_ref[...] = (x * jax.nn.sigmoid(y)).astype(o_ref.dtype)


# --------------------------------------------------------------------------
# Wrapper
# --------------------------------------------------------------------------
def simam(x, e_lambda=1e-4):
    """SimAM attention for x of shape (B, C, L); matches the PyTorch forward."""
    b, c, l = x.shape
    if l <= 1:
        # Same divide-by-zero hazard as the PyTorch reference (n = L - 1).
        raise ValueError("SimAM requires L > 1 (n = L - 1 must be nonzero).")
    n = l - 1
    rows = b * c

    x2 = x.reshape(rows, l)

    # Choose layout: pack several small rows per 128-lane row, or pad large
    # rows up to a multiple of 128 lanes.
    if l < 128:
        seg = _next_pow2(l)            # segment length; divides 128
        groups = 128 // seg            # SimAM rows packed per lane row
    else:
        seg = _round_up(l, 128)
        groups = 1
    width = seg * groups               # lane width per block row (multiple of 128)

    if seg != l:
        x2 = jnp.pad(x2, ((0, 0), (0, seg - l)))            # zero lanes (exact)
    rows_g = _round_up(rows, groups)
    if rows_g != rows:
        x2 = jnp.pad(x2, ((0, rows_g - rows), (0, 0)))       # zero rows (harmless)
    prows = rows_g // groups
    if groups > 1:
        x2 = x2.reshape(prows, width)                        # contiguous -> free

    # Row tile: multiple of 8, ~1-2 MiB f32 per block, capped at the data.
    target_bytes = (2 * 1024 * 1024) if groups == 1 else (1 * 1024 * 1024)
    tr_budget = max(8, (target_bytes // (width * 4)) // 8 * 8)
    tr = min(tr_budget, _round_up(prows, 8))
    prows_pad = _round_up(prows, tr)
    if prows_pad != prows:
        x2 = jnp.pad(x2, ((0, prows_pad - prows), (0, 0)))

    if groups > 1:
        kernel = functools.partial(
            _simam_packed_kernel, e_lambda=float(e_lambda), inv_l=1.0 / float(l),
            inv_n=1.0 / float(n), l=float(l), seg=seg, groups=groups)
    else:
        kernel = functools.partial(
            _simam_rowwise_kernel, e_lambda=float(e_lambda), inv_l=1.0 / float(l),
            inv_n=1.0 / float(n), l=float(l))

    out = pl.pallas_call(
        kernel,
        out_shape=jax.ShapeDtypeStruct((prows_pad, width), x.dtype),
        grid_spec=pltpu.PrefetchScalarGridSpec(
            num_scalar_prefetch=0,
            grid=(prows_pad // tr,),
            in_specs=[pl.BlockSpec((tr, width), lambda i: (i, 0))],
            out_specs=pl.BlockSpec((tr, width), lambda i: (i, 0)),
        ),
        compiler_params=pltpu.CompilerParams(
            dimension_semantics=("parallel",),
            # Explicit scoped-VMEM budget: plenty for double-buffered blocks +
            # f32 temporaries, fits v7x's 64 MiB physical VMEM, raises v5e's
            # 16 MiB scoped default.
            vmem_limit_bytes=32 * 1024 * 1024,
        ),
    )(x2)

    out = out[:prows]
    if groups > 1:
        out = out.reshape(prows * groups, seg)
    return out[:rows, :l].reshape(b, c, l)


def simam_reference(x, e_lambda=1e-4):
    """Pure-JAX reference mirroring the PyTorch forward exactly."""
    x = x.astype(jnp.float32)
    l = x.shape[2]
    n = l - 1
    d = (x - jnp.mean(x, axis=2, keepdims=True)) ** 2
    y = d / (4.0 * (jnp.sum(d, axis=2, keepdims=True) / n + e_lambda)) + 0.5
    return x * jax.nn.sigmoid(y)


if __name__ == "__main__":
    key = jax.random.PRNGKey(0)
    k0, k1, k2 = jax.random.split(key, 3)

    # Primary shape implied by the module's (B, C, L) forward: packed small-L path.
    b, c, l = 2, 4, 16
    x = jax.random.normal(k0, (b, c, l), dtype=jnp.float32)
    out = jax.block_until_ready(simam(x))
    ref = simam_reference(x)
    assert out.shape == (b, c, l)
    assert jnp.allclose(out, ref, atol=1e-5, rtol=1e-4), "mismatch (packed path)"

    # Row-wise path (L padded to a multiple of 128 lanes).
    xb = jax.random.normal(k1, (2, 3, 200), dtype=jnp.float32)
    outb = jax.block_until_ready(simam(xb))
    assert jnp.allclose(outb, simam_reference(xb), atol=1e-5, rtol=1e-4), \
        "mismatch (row-wise path)"

    # Packed path with intra-segment padding (L not a power of two).
    xc = jax.random.normal(k2, (2, 5, 24), dtype=jnp.float32)
    outc = jax.block_until_ready(simam(xc))
    assert jnp.allclose(outc, simam_reference(xc), atol=1e-5, rtol=1e-4), \
        "mismatch (packed + padded-segment path)"

    print("KERNEL_OK")
</pallas_src>

<mosaic_0001>
module attributes {stable_mosaic.version = 11 : i64} {
  func.func @_simam_packed_kernel(%arg0: i32, %arg1: memref<8x128xf32, #tpu.memory_space<vmem>>, %arg2: memref<8x128xf32, #tpu.memory_space<vmem>>) attributes {dimension_semantics = [#tpu.dimension_semantics<parallel>], iteration_bounds = array<i64: 1>, scalar_prefetch = 0 : i64, scratch_operands = 0 : i64, tpu.core_type = #tpu.core_type<tc>, window_params = [{transform_indices = @transform_0, window_bounds = array<i64: 8, 128>}, {transform_indices = @transform_1, window_bounds = array<i64: 8, 128>}]} {
    %c0 = arith.constant 0 : index
    %c0_0 = arith.constant 0 : index
    %0 = vector.load %arg1[%c0, %c0_0] : memref<8x128xf32, #tpu.memory_space<vmem>>, vector<8x128xf32>
    %1 = arith.mulf %0, %0 : vector<8x128xf32>
    %2 = tpu.iota {dimensions = array<i32: 0>} : vector<128x8xi32>
    %3 = tpu.iota {dimensions = array<i32: 1>} : vector<128x8xi32>
    %c16_i32 = arith.constant 16 : i32
    %4 = vector.broadcast %c16_i32 : i32 to vector<128x8xi32>
    %5 = arith.muli %3, %4 : vector<128x8xi32>
    %6 = arith.cmpi sge, %2, %5 : vector<128x8xi32>
    %c1_i32 = arith.constant 1 : i32
    %7 = vector.broadcast %c1_i32 : i32 to vector<128x8xi32>
    %8 = arith.addi %3, %7 : vector<128x8xi32>
    %c16_i32_1 = arith.constant 16 : i32
    %9 = vector.broadcast %c16_i32_1 : i32 to vector<128x8xi32>
    %10 = arith.muli %8, %9 : vector<128x8xi32>
    %11 = arith.cmpi slt, %2, %10 : vector<128x8xi32>
    %12 = arith.andi %6, %11 : vector<128x8xi1>
    %cst = arith.constant 1.000000e+00 : f32
    %cst_2 = arith.constant 0.000000e+00 : f32
    %13 = vector.broadcast %cst : f32 to vector<128x8xf32>
    %14 = vector.broadcast %cst_2 : f32 to vector<128x8xf32>
    %15 = arith.select %12, %13, %14 : vector<128x8xi1>, vector<128x8xf32>
    %16 = arith.truncf %15 : vector<128x8xf32> to vector<128x8xbf16>
    %17 = tpu.iota {dimensions = array<i32: 0>} : vector<8x128xi32>
    %18 = tpu.iota {dimensions = array<i32: 1>} : vector<8x128xi32>
    %c16_i32_3 = arith.constant 16 : i32
    %19 = vector.broadcast %c16_i32_3 : i32 to vector<8x128xi32>
    %20 = arith.muli %17, %19 : vector<8x128xi32>
    %21 = arith.cmpi sge, %18, %20 : vector<8x128xi32>
    %c1_i32_4 = arith.constant 1 : i32
    %22 = vector.broadcast %c1_i32_4 : i32 to vector<8x128xi32>
    %23 = arith.addi %17, %22 : vector<8x128xi32>
    %c16_i32_5 = arith.constant 16 : i32
    %24 = vector.broadcast %c16_i32_5 : i32 to vector<8x128xi32>
    %25 = arith.muli %23, %24 : vector<8x128xi32>
    %26 = arith.cmpi slt, %18, %25 : vector<8x128xi32>
    %27 = arith.andi %21, %26 : vector<8x128xi1>
    %cst_6 = arith.constant 1.000000e+00 : f32
    %cst_7 = arith.constant 0.000000e+00 : f32
    %28 = vector.broadcast %cst_6 : f32 to vector<8x128xf32>
    %29 = vector.broadcast %cst_7 : f32 to vector<8x128xf32>
    %30 = arith.select %27, %28, %29 : vector<8x128xi1>, vector<8x128xf32>
    %31 = arith.truncf %30 : vector<8x128xf32> to vector<8x128xbf16>
    %32 = arith.truncf %0 : vector<8x128xf32> to vector<8x128xbf16>
    %33 = arith.extf %32 : vector<8x128xbf16> to vector<8x128xf32>
    %34 = arith.subf %0, %33 : vector<8x128xf32>
    %35 = arith.truncf %34 : vector<8x128xf32> to vector<8x128xbf16>
    %cst_8 = arith.constant dense<0.000000e+00> : vector<8x8xf32>
    %36 = tpu.matmul %32, %16, %cst_8 {dimension_numbers = #tpu.dot_dimension_numbers<[1], [0], [0], [1], [0, 0, 1, 1], [], []>} : vector<8x128xbf16>, vector<128x8xbf16>, vector<8x8xf32> -> vector<8x8xf32>
    %cst_9 = arith.constant dense<0.000000e+00> : vector<8x8xf32>
    %37 = tpu.matmul %35, %16, %cst_9 {dimension_numbers = #tpu.dot_dimension_numbers<[1], [0], [0], [1], [0, 0, 1, 1], [], []>} : vector<8x128xbf16>, vector<128x8xbf16>, vector<8x8xf32> -> vector<8x8xf32>
    %38 = arith.addf %36, %37 : vector<8x8xf32>
    %39 = arith.truncf %1 : vector<8x128xf32> to vector<8x128xbf16>
    %40 = arith.extf %39 : vector<8x128xbf16> to vector<8x128xf32>
    %41 = arith.subf %1, %40 : vector<8x128xf32>
    %42 = arith.truncf %41 : vector<8x128xf32> to vector<8x128xbf16>
    %cst_10 = arith.constant dense<0.000000e+00> : vector<8x8xf32>
    %43 = tpu.matmul %39, %16, %cst_10 {dimension_numbers = #tpu.dot_dimension_numbers<[1], [0], [0], [1], [0, 0, 1, 1], [], []>} : vector<8x128xbf16>, vector<128x8xbf16>, vector<8x8xf32> -> vector<8x8xf32>
    %cst_11 = arith.constant dense<0.000000e+00> : vector<8x8xf32>
    %44 = tpu.matmul %42, %16, %cst_11 {dimension_numbers = #tpu.dot_dimension_numbers<[1], [0], [0], [1], [0, 0, 1, 1], [], []>} : vector<8x128xbf16>, vector<128x8xbf16>, vector<8x8xf32> -> vector<8x8xf32>
    %45 = arith.addf %43, %44 : vector<8x8xf32>
    %cst_12 = arith.constant 6.250000e-02 : f32
    %46 = vector.broadcast %cst_12 : f32 to vector<8x8xf32>
    %47 = arith.mulf %38, %46 : vector<8x8xf32>
    %48 = arith.mulf %47, %47 : vector<8x8xf32>
    %cst_13 = arith.constant 1.600000e+01 : f32
    %49 = vector.broadcast %cst_13 : f32 to vector<8x8xf32>
    %50 = arith.mulf %49, %48 : vector<8x8xf32>
    %51 = arith.subf %45, %50 : vector<8x8xf32>
    %cst_14 = arith.constant 0.0666666701 : f32
    %52 = vector.broadcast %cst_14 : f32 to vector<8x8xf32>
    %53 = arith.mulf %51, %52 : vector<8x8xf32>
    %cst_15 = arith.constant 9.99999974E-5 : f32
    %54 = vector.broadcast %cst_15 : f32 to vector<8x8xf32>
    %55 = arith.addf %53, %54 : vector<8x8xf32>
    %cst_16 = arith.constant 4.000000e+00 : f32
    %56 = vector.broadcast %cst_16 : f32 to vector<8x8xf32>
    %57 = arith.mulf %56, %55 : vector<8x8xf32>
    %58 = tpu.reciprocal %57 : vector<8x8xf32> -> vector<8x8xf32>
    %59 = arith.truncf %47 : vector<8x8xf32> to vector<8x8xbf16>
    %60 = arith.extf %59 : vector<8x8xbf16> to vector<8x8xf32>
    %61 = arith.subf %47, %60 : vector<8x8xf32>
    %62 = arith.truncf %61 : vector<8x8xf32> to vector<8x8xbf16>
    %cst_17 = arith.constant dense<0.000000e+00> : vector<8x128xf32>
    %63 = tpu.matmul %59, %31, %cst_17 {dimension_numbers = #tpu.dot_dimension_numbers<[1], [0], [0], [1], [0, 0, 1, 1], [], []>} : vector<8x8xbf16>, vector<8x128xbf16>, vector<8x128xf32> -> vector<8x128xf32>
    %cst_18 = arith.constant dense<0.000000e+00> : vector<8x128xf32>
    %64 = tpu.matmul %62, %31, %cst_18 {dimension_numbers = #tpu.dot_dimension_numbers<[1], [0], [0], [1], [0, 0, 1, 1], [], []>} : vector<8x8xbf16>, vector<8x128xbf16>, vector<8x128xf32> -> vector<8x128xf32>
    %65 = arith.addf %63, %64 : vector<8x128xf32>
    %66 = arith.truncf %58 : vector<8x8xf32> to vector<8x8xbf16>
    %67 = arith.extf %66 : vector<8x8xbf16> to vector<8x8xf32>
    %68 = arith.subf %58, %67 : vector<8x8xf32>
    %69 = arith.truncf %68 : vector<8x8xf32> to vector<8x8xbf16>
    %cst_19 = arith.constant dense<0.000000e+00> : vector<8x128xf32>
    %70 = tpu.matmul %66, %31, %cst_19 {dimension_numbers = #tpu.dot_dimension_numbers<[1], [0], [0], [1], [0, 0, 1, 1], [], []>} : vector<8x8xbf16>, vector<8x128xbf16>, vector<8x128xf32> -> vector<8x128xf32>
    %cst_20 = arith.constant dense<0.000000e+00> : vector<8x128xf32>
    %71 = tpu.matmul %69, %31, %cst_20 {dimension_numbers = #tpu.dot_dimension_numbers<[1], [0], [0], [1], [0, 0, 1, 1], [], []>} : vector<8x8xbf16>, vector<8x128xbf16>, vector<8x128xf32> -> vector<8x128xf32>
    %72 = arith.addf %70, %71 : vector<8x128xf32>
    %73 = arith.subf %0, %65 : vector<8x128xf32>
    %74 = arith.mulf %73, %73 : vector<8x128xf32>
    %75 = arith.mulf %74, %72 : vector<8x128xf32>
    %cst_21 = arith.constant 5.000000e-01 : f32
    %76 = vector.broadcast %cst_21 : f32 to vector<8x128xf32>
    %77 = arith.addf %75, %76 : vector<8x128xf32>
    %78 = arith.negf %77 : vector<8x128xf32>
    %79 = math.exp %78 : vector<8x128xf32>
    %cst_22 = arith.constant 1.000000e+00 : f32
    %80 = vector.broadcast %cst_22 : f32 to vector<8x128xf32>
    %81 = arith.addf %80, %79 : vector<8x128xf32>
    %82 = arith.divf %80, %81 : vector<8x128xf32>
    %83 = arith.mulf %0, %82 : vector<8x128xf32>
    %c0_23 = arith.constant 0 : index
    %c0_24 = arith.constant 0 : index
    %84 = vector.load %arg2[%c0_23, %c0_24] : memref<8x128xf32, #tpu.memory_space<vmem>>, vector<8x128xf32>
    tpu.vector_store %arg2[%c0_23, %c0_24], %83 {strides = array<i32>} : memref<8x128xf32, #tpu.memory_space<vmem>>, vector<8x128xf32>,
    return
  }
  func.func @transform_0(%arg0: i32) -> (i32, i32) {
    %c0_i32 = arith.constant 0 : i32
    %c0_i32_0 = arith.constant 0 : i32
    return %arg0, %c0_i32 : i32, i32
  }
  func.func @transform_1(%arg0: i32) -> (i32, i32) {
    %c0_i32 = arith.constant 0 : i32
    %c0_i32_0 = arith.constant 0 : i32
    return %arg0, %c0_i32 : i32, i32
  }
}

</mosaic_0001>

<llo_original>
// kernel: tpu_custom_call.1
$region0: #{tpu_custom_call.1}
  #allocation0 [shape = 'u32[]', space=smem, size = 0x4, offset = 0x4, fixed_abs, tag = 'smem constant byte address 0x4 - core index']
  #allocation1 [shape = 'u32[144,128]{1,0:T(1,128)}', space=vmem, size = 0x12000, scoped, tag = 'internal scratch']
  %s0 = inlined_call_operand.hbm [shape: f32[8,128], index: 0, kind: input, shape index: {}]
  %s1 = inlined_call_operand.hbm [shape: f32[8,128], index: 1, kind: output, shape index: {}]
  %s2 = sld [smem:[#allocation0]]
  $region18: #{tpu_custom_call.1} parent=0
    _
  %s4 = ssub.s32 1, %s2
  %s5 = scalar_select 0, %s4, %s2
  $region1: #{tpu_custom_call.1} parent=0
    #allocation2 [shape = 'u8[4096]{0}', space=vmem, size = 0x1000, scoped, tag = 'input window, operand 0, single buffered']
    #allocation3 [shape = 's32[1]{0}', space=sflag, size = 0x4, scoped, tag = 'scoped memory for tpu_custom_call.1']
    #allocation4 [shape = 's32[1]{0}', space=sflag, size = 0x4, scoped, tag = 'scoped memory for tpu_custom_call.1']
    #allocation5 [shape = 'u8[4096]{0}', space=vmem, size = 0x1000, scoped, tag = 'output window, operand 0, single buffered']
    %6 = vsyncpa [#allocation3], 0
    %7 = vsyncpa [#allocation4], 0
    // Predicated region
    $region2: #{tpu_custom_call.1} parent=1 // pred_check
      _
    $region3: #{tpu_custom_call.1} parent=1 // pred_check_branch
      %9 = sbr.rel (0) target = $region5
    $region4: #{tpu_custom_call.1} parent=1 // pred_region
      %s11 = ssub.s32 128, 128
      %12 = vsyncadd [#allocation3], %s11
      %s14 = sshll.u32 [#allocation2], 4
      %s15 = int_to_ptr.vmem [resolvable:$true] %s14
      %17 = dma.hbm_to_vmem [thread:$0]  %s0, 128, %s15, [#allocation3]
    $region5: #{tpu_custom_call.1} parent=1 // pred_fallthru
      _
    // Predicated region
    $region6: #{tpu_custom_call.1} parent=1 // pred_check
      _
    $region7: #{tpu_custom_call.1} parent=1 // pred_check_branch
      %19 = sbr.rel (0) target = $region9
    $region8: #{tpu_custom_call.1} parent=1 // pred_region
      %20 = dma.done [#allocation3], 128
    $region9: #{tpu_custom_call.1} parent=1 // pred_fallthru
      _
    %v22 = vld [vmem:[#allocation2] sm:$0xff]
    %v23 = vmul.f32 %v22, %v22
    %v24 = vlaneseq
    %v25 = vshrl.u32 %v24, 7
    %v26 = vadd.s32 %v25, 8
    %v27 = vadd.s32 %v25, 16
    %v28 = vadd.s32 %v25, 24
    %v29 = vadd.s32 %v25, 32
    %v30 = vadd.s32 %v25, 40
    %v31 = vadd.s32 %v25, 48
    %v32 = vadd.s32 %v25, 56
    %v33 = vadd.s32 %v25, 64
    %v34 = vadd.s32 %v25, 72
    %v35 = vadd.s32 %v25, 80
    %v36 = vadd.s32 %v25, 88
    %v37 = vadd.s32 %v25, 96
    %v38 = vadd.s32 %v25, 104
    %v39 = vadd.s32 %v25, 112
    %v40 = vadd.s32 %v25, 120
    %v41 = vlaneseq
    %v42 = vand.u32 %v41, 127
    %v43 = vmul.u32 %v42, 16
    %vm44 = vcmp.ge.s32.totalorder %v25, %v43
    %vm45 = vcmp.ge.s32.totalorder %v26, %v43
    %vm46 = vcmp.ge.s32.totalorder %v27, %v43
    %vm47 = vcmp.ge.s32.totalorder %v28, %v43
    %vm48 = vcmp.ge.s32.totalorder %v29, %v43
    %vm49 = vcmp.ge.s32.totalorder %v30, %v43
    %vm50 = vcmp.ge.s32.totalorder %v31, %v43
    %vm51 = vcmp.ge.s32.totalorder %v32, %v43
    %vm52 = vcmp.ge.s32.totalorder %v33, %v43
    %vm53 = vcmp.ge.s32.totalorder %v34, %v43
    %vm54 = vcmp.ge.s32.totalorder %v35, %v43
    %vm55 = vcmp.ge.s32.totalorder %v36, %v43
    %vm56 = vcmp.ge.s32.totalorder %v37, %v43
    %vm57 = vcmp.ge.s32.totalorder %v38, %v43
    %vm58 = vcmp.ge.s32.totalorder %v39, %v43
    %vm59 = vcmp.ge.s32.totalorder %v40, %v43
    %v60 = vadd.s32 %v42, 1
    %v61 = vmul.u32 %v60, 16
    %vm62 = vcmp.lt.s32.totalorder %v25, %v61
    %vm63 = vcmp.lt.s32.totalorder %v26, %v61
    %vm64 = vcmp.lt.s32.totalorder %v27, %v61
    %vm65 = vcmp.lt.s32.totalorder %v28, %v61
    %vm66 = vcmp.lt.s32.totalorder %v29, %v61
    %vm67 = vcmp.lt.s32.totalorder %v30, %v61
    %vm68 = vcmp.lt.s32.totalorder %v31, %v61
    %vm69 = vcmp.lt.s32.totalorder %v32, %v61
    %vm70 = vcmp.lt.s32.totalorder %v33, %v61
    %vm71 = vcmp.lt.s32.totalorder %v34, %v61
    %vm72 = vcmp.lt.s32.totalorder %v35, %v61
    %vm73 = vcmp.lt.s32.totalorder %v36, %v61
    %vm74 = vcmp.lt.s32.totalorder %v37, %v61
    %vm75 = vcmp.lt.s32.totalorder %v38, %v61
    %vm76 = vcmp.lt.s32.totalorder %v39, %v61
    %vm77 = vcmp.lt.s32.totalorder %v40, %v61
    %vm78 = vmand %vm44, %vm62
    %vm79 = vmand %vm45, %vm63
    %vm80 = vmand %vm46, %vm64
    %vm81 = vmand %vm47, %vm65
    %vm82 = vmand %vm48, %vm66
    %vm83 = vmand %vm49, %vm67
    %vm84 = vmand %vm50, %vm68
    %vm85 = vmand %vm51, %vm69
    %vm86 = vmand %vm52, %vm70
    %vm87 = vmand %vm53, %vm71
    %vm88 = vmand %vm54, %vm72
    %vm89 = vmand %vm55, %vm73
    %vm90 = vmand %vm56, %vm74
    %vm91 = vmand %vm57, %vm75
    %vm92 = vmand %vm58, %vm76
    %vm93 = vmand %vm59, %vm77
    %v94 = vsel %vm78, 1.0, 0.0
    %v95 = vsel %vm79, 1.0, 0.0
    %v96 = vsel %vm80, 1.0, 0.0
    %v97 = vsel %vm81, 1.0, 0.0
    %v98 = vsel %vm82, 1.0, 0.0
    %v99 = vsel %vm83, 1.0, 0.0
    %v100 = vsel %vm84, 1.0, 0.0
    %v101 = vsel %vm85, 1.0, 0.0
    %v102 = vsel %vm86, 1.0, 0.0
    %v103 = vsel %vm87, 1.0, 0.0
    %v104 = vsel %vm88, 1.0, 0.0
    %v105 = vsel %vm89, 1.0, 0.0
    %v106 = vsel %vm90, 1.0, 0.0
    %v107 = vsel %vm91, 1.0, 0.0
    %v108 = vsel %vm92, 1.0, 0.0
    %v109 = vsel %vm93, 1.0, 0.0
    %v110 = vpack.c.bf16 %v95, %v94
    %v111 = vpack.c.bf16 %v97, %v96
    %v112 = vpack.c.bf16 %v99, %v98
    %v113 = vpack.c.bf16 %v101, %v100
    %v114 = vpack.c.bf16 %v103, %v102
    %v115 = vpack.c.bf16 %v105, %v104
    %v116 = vpack.c.bf16 %v107, %v106
    %v117 = vpack.c.bf16 %v109, %v108
    %v118 = vmul.u32 %v25, 16
    %vm119 = vcmp.ge.s32.totalorder %v42, %v118
    %v120 = vadd.s32 %v25, 1
    %v121 = vmul.u32 %v120, 16
    %vm122 = vcmp.lt.s32.totalorder %v42, %v121
    %vm123 = vmand %vm119, %vm122
    %v124 = vsel %vm123, 1.0, 0.0
    %v125 = vpack.c.bf16 %v124, %v124
    %v126 = vpack.c.bf16 %v22, %v22
    %v127 = vunpack.c.l.bf16 %v126
    %v128 = vsub.f32 %v22, %v127
    %v129 = vpack.c.bf16 %v128, %v128
    %130 = vmatprep.subr.bf16.mxu0 0
    %131 = vmatpush1.bf16.msra.mxu0 %v117
    %132 = vmatprep.subr.bf16.mxu0 0
    %133 = vmatpush1.bf16.msra.mxu0 %v116
    %134 = vmatprep.subr.bf16.mxu0 0
    %135 = vmatpush1.bf16.msra.mxu0 %v115
    %136 = vmatprep.subr.bf16.mxu0 0
    %137 = vmatpush1.bf16.msra.mxu0 %v114
    %138 = vmatprep.subr.bf16.mxu0 0
    %139 = vmatpush1.bf16.msra.mxu0 %v113
    %140 = vmatprep.subr.bf16.mxu0 0
    %141 = vmatpush1.bf16.msra.mxu0 %v112
    %142 = vmatprep.subr.bf16.mxu0 0
    %143 = vmatpush1.bf16.msra.mxu0 %v111
    %144 = vmatprep.subr.bf16.mxu0 0
    %145 = vmatpush1.bf16.msra.mxu0 %v110
    %146 = vmatprep.subr.bf16.mxu0 0
    %147 = vmatpush2.bf16.msra.mxu0 0
    %148 = vmatprep.subr.bf16.mxu0 0
    %149 = vmatpush2.bf16.msra.mxu0 0
    %150 = vmatprep.subr.bf16.mxu0 0
    %151 = vmatpush2.bf16.msra.mxu0 0
    %152 = vmatprep.subr.bf16.mxu0 0
    %153 = vmatpush2.bf16.msra.mxu0 0
    %154 = vmatprep.subr.bf16.mxu0 0
    %155 = vmatpush2.bf16.msra.mxu0 0
    %156 = vmatprep.subr.bf16.mxu0 0
    %157 = vmatpush2.bf16.msra.mxu0 0
    %158 = vmatprep.subr.bf16.mxu0 0
    %159 = vmatpush2.bf16.msra.mxu0 0
    %160 = vmatprep.subr.bf16.mxu0 0
    %161 = vmatpush2.bf16.msra.mxu0 0
    %162 = vmatprep.mubr.bf16.mxu0 0
    %163 = vmatmul.mubr.bf16.gmra.mxu0 %v129
    %v164 = vpop.f32.mrf.mxu0
    %v165 = vadd.f32 0.0, %v164
    %v166 = vpop.f32.mrf.mxu0
    %v167 = vpop.f32.mrf.mxu0
    %v168 = vpop.f32.mrf.mxu0
    %169 = vdwg.mxu0
    %170 = vmatprep.subr.bf16.mxu0 0
    %171 = vmatpush1.bf16.msra.mxu0 %v117
    %172 = vmatprep.subr.bf16.mxu0 0
    %173 = vmatpush1.bf16.msra.mxu0 %v116
    %174 = vmatprep.subr.bf16.mxu0 0
    %175 = vmatpush1.bf16.msra.mxu0 %v115
    %176 = vmatprep.subr.bf16.mxu0 0
    %177 = vmatpush1.bf16.msra.mxu0 %v114
    %178 = vmatprep.subr.bf16.mxu0 0
    %179 = vmatpush1.bf16.msra.mxu0 %v113
    %180 = vmatprep.subr.bf16.mxu0 0
    %181 = vmatpush1.bf16.msra.mxu0 %v112
    %182 = vmatprep.subr.bf16.mxu0 0
    %183 = vmatpush1.bf16.msra.mxu0 %v111
    %184 = vmatprep.subr.bf16.mxu0 0
    %185 = vmatpush1.bf16.msra.mxu0 %v110
    %186 = vmatprep.subr.bf16.mxu0 0
    %187 = vmatpush2.bf16.msra.mxu0 0
    %188 = vmatprep.subr.bf16.mxu0 0
    %189 = vmatpush2.bf16.msra.mxu0 0
    %190 = vmatprep.subr.bf16.mxu0 0
    %191 = vmatpush2.bf16.msra.mxu0 0
    %192 = vmatprep.subr.bf16.mxu0 0
    %193 = vmatpush2.bf16.msra.mxu0 0
    %194 = vmatprep.subr.bf16.mxu0 0
    %195 = vmatpush2.bf16.msra.mxu0 0
    %196 = vmatprep.subr.bf16.mxu0 0
    %197 = vmatpush2.bf16.msra.mxu0 0
    %198 = vmatprep.subr.bf16.mxu0 0
    %199 = vmatpush2.bf16.msra.mxu0 0
    %200 = vmatprep.subr.bf16.mxu0 0
    %201 = vmatpush2.bf16.msra.mxu0 0
    %202 = vmatprep.mubr.bf16.mxu0 0
    %203 = vmatmul.mubr.bf16.gmra.mxu0 %v126
    %v204 = vpop.f32.mrf.mxu0
    %v205 = vadd.f32 %v165, %v204
    %v206 = vpop.f32.mrf.mxu0
    %v207 = vpop.f32.mrf.mxu0
    %v208 = vpop.f32.mrf.mxu0
    %209 = vdwg.mxu0
    %v210 = vpack.c.bf16 %v23, %v23
    %v211 = vunpack.c.l.bf16 %v210
    %v212 = vsub.f32 %v23, %v211
    %v213 = vpack.c.bf16 %v212, %v212
    %214 = vmatprep.subr.bf16.mxu0 0
    %215 = vmatpush1.bf16.msra.mxu0 %v117
    %216 = vmatprep.subr.bf16.mxu0 0
    %217 = vmatpush1.bf16.msra.mxu0 %v116
    %218 = vmatprep.subr.bf16.mxu0 0
    %219 = vmatpush1.bf16.msra.mxu0 %v115
    %220 = vmatprep.subr.bf16.mxu0 0
    %221 = vmatpush1.bf16.msra.mxu0 %v114
    %222 = vmatprep.subr.bf16.mxu0 0
    %223 = vmatpush1.bf16.msra.mxu0 %v113
    %224 = vmatprep.subr.bf16.mxu0 0
    %225 = vmatpush1.bf16.msra.mxu0 %v112
    %226 = vmatprep.subr.bf16.mxu0 0
    %227 = vmatpush1.bf16.msra.mxu0 %v111
    %228 = vmatprep.subr.bf16.mxu0 0
    %229 = vmatpush1.bf16.msra.mxu0 %v110
    %230 = vmatprep.subr.bf16.mxu0 0
    %231 = vmatpush2.bf16.msra.mxu0 0
    %232 = vmatprep.subr.bf16.mxu0 0
    %233 = vmatpush2.bf16.msra.mxu0 0
    %234 = vmatprep.subr.bf16.mxu0 0
    %235 = vmatpush2.bf16.msra.mxu0 0
    %236 = vmatprep.subr.bf16.mxu0 0
    %237 = vmatpush2.bf16.msra.mxu0 0
    %238 = vmatprep.subr.bf16.mxu0 0
    %239 = vmatpush2.bf16.msra.mxu0 0
    %240 = vmatprep.subr.bf16.mxu0 0
    %241 = vmatpush2.bf16.msra.mxu0 0
    %242 = vmatprep.subr.bf16.mxu0 0
    %243 = vmatpush2.bf16.msra.mxu0 0
    %244 = vmatprep.subr.bf16.mxu0 0
    %245 = vmatpush2.bf16.msra.mxu0 0
    %246 = vmatprep.mubr.bf16.mxu0 0
    %247 = vmatmul.mubr.bf16.gmra.mxu0 %v213
    %v248 = vpop.f32.mrf.mxu0
    %v249 = vadd.f32 0.0, %v248
    %v250 = vpop.f32.mrf.mxu0
    %v251 = vpop.f32.mrf.mxu0
    %v252 = vpop.f32.mrf.mxu0
    %253 = vdwg.mxu0
    %254 = vmatprep.subr.bf16.mxu0 0
    %255 = vmatpush1.bf16.msra.mxu0 %v117
    %256 = vmatprep.subr.bf16.mxu0 0
    %257 = vmatpush1.bf16.msra.mxu0 %v116
    %258 = vmatprep.subr.bf16.mxu0 0
    %259 = vmatpush1.bf16.msra.mxu0 %v115
    %260 = vmatprep.subr.bf16.mxu0 0
    %261 = vmatpush1.bf16.msra.mxu0 %v114
    %262 = vmatprep.subr.bf16.mxu0 0
    %263 = vmatpush1.bf16.msra.mxu0 %v113
    %264 = vmatprep.subr.bf16.mxu0 0
    %265 = vmatpush1.bf16.msra.mxu0 %v112
    %266 = vmatprep.subr.bf16.mxu0 0
    %267 = vmatpush1.bf16.msra.mxu0 %v111
    %268 = vmatprep.subr.bf16.mxu0 0
    %269 = vmatpush1.bf16.msra.mxu0 %v110
    %270 = vmatprep.subr.bf16.mxu0 0
    %271 = vmatpush2.bf16.msra.mxu0 0
    %272 = vmatprep.subr.bf16.mxu0 0
    %273 = vmatpush2.bf16.msra.mxu0 0
    %274 = vmatprep.subr.bf16.mxu0 0
    %275 = vmatpush2.bf16.msra.mxu0 0
    %276 = vmatprep.subr.bf16.mxu0 0
    %277 = vmatpush2.bf16.msra.mxu0 0
    %278 = vmatprep.subr.bf16.mxu0 0
    %279 = vmatpush2.bf16.msra.mxu0 0
    %280 = vmatprep.subr.bf16.mxu0 0
    %281 = vmatpush2.bf16.msra.mxu0 0
    %282 = vmatprep.subr.bf16.mxu0 0
    %283 = vmatpush2.bf16.msra.mxu0 0
    %284 = vmatprep.subr.bf16.mxu0 0
    %285 = vmatpush2.bf16.msra.mxu0 0
    %286 = vmatprep.mubr.bf16.mxu0 0
    %287 = vmatmul.mubr.bf16.gmra.mxu0 %v210
    %v288 = vpop.f32.mrf.mxu0
    %v289 = vadd.f32 %v249, %v288
    %v290 = vpop.f32.mrf.mxu0
    %v291 = vpop.f32.mrf.mxu0
    %v292 = vpop.f32.mrf.mxu0
    %293 = vdwg.mxu0
    %v294 = vmul.f32 %v205, 0.0625
    %v295 = vmul.f32 %v294, %v294
    %v296 = vmul.f32 %v295, 16.0
    %v297 = vsub.f32 %v289, %v296
    %v298 = vmul.f32 %v297, 0.06666667
    %v299 = vadd.f32 %v298, 0.0001
    %v300 = vmul.f32 %v299, 4.0
    %v301 = vrcp.pop %v300
    %v302 = vpack.c.bf16 %v294, %v294
    %v303 = vunpack.c.l.bf16 %v302
    %v304 = vsub.f32 %v294, %v303
    %v305 = vpack.c.bf16 %v304, %v304
    %vm306 = vcmask 64512
    %v308 = vsel %vm306, %v305, 0
    %vm310 = vcmask 1043456
    %v312 = vsel %vm310, %v125, 0
    %314 = vmatprep.subr.bf16.mxu0 0
    %315 = vmatpush1.bf16.msra.mxu0 0
    %316 = vmatprep.subr.bf16.mxu0 0
    %317 = vmatpush1.bf16.msra.mxu0 0
    %318 = vmatprep.subr.bf16.mxu0 0
    %319 = vmatpush1.bf16.msra.mxu0 0
    %320 = vmatprep.subr.bf16.mxu0 0
    %321 = vmatpush1.bf16.msra.mxu0 0
    %322 = vmatprep.subr.bf16.mxu0 0
    %323 = vmatpush1.bf16.msra.mxu0 0
    %324 = vmatprep.subr.bf16.mxu0 0
    %325 = vmatpush1.bf16.msra.mxu0 0
    %326 = vmatprep.subr.bf16.mxu0 0
    %327 = vmatpush1.bf16.msra.mxu0 0
    %328 = vmatprep.subr.bf16.mxu0 0
    %329 = vmatpush1.bf16.msra.mxu0 %v312
    %330 = vmatprep.subr.bf16.mxu0 0
    %331 = vmatpush2.bf16.msra.mxu0 0
    %332 = vmatprep.subr.bf16.mxu0 0
    %333 = vmatpush2.bf16.msra.mxu0 0
    %334 = vmatprep.subr.bf16.mxu0 0
    %335 = vmatpush2.bf16.msra.mxu0 0
    %336 = vmatprep.subr.bf16.mxu0 0
    %337 = vmatpush2.bf16.msra.mxu0 0
    %338 = vmatprep.subr.bf16.mxu0 0
    %339 = vmatpush2.bf16.msra.mxu0 0
    %340 = vmatprep.subr.bf16.mxu0 0
    %341 = vmatpush2.bf16.msra.mxu0 0
    %342 = vmatprep.subr.bf16.mxu0 0
    %343 = vmatpush2.bf16.msra.mxu0 0
    %344 = vmatprep.subr.bf16.mxu0 0
    %345 = vmatpush2.bf16.msra.mxu0 0
    %346 = vmatprep.mubr.bf16.mxu0 0
    %347 = vmatmul.mubr.bf16.gmra.mxu0 %v308
    %v348 = vpop.f32.mrf.mxu0
    %v349 = vadd.f32 0.0, %v348
    %v350 = vpop.f32.mrf.mxu0
    %v351 = vpop.f32.mrf.mxu0
    %v352 = vpop.f32.mrf.mxu0
    %353 = vdwg.mxu0
    %v355 = vsel %vm306, %v302, 0
    %357 = vmatprep.subr.bf16.mxu0 0
    %358 = vmatpush1.bf16.msra.mxu0 0
    %359 = vmatprep.subr.bf16.mxu0 0
    %360 = vmatpush1.bf16.msra.mxu0 0
    %361 = vmatprep.subr.bf16.mxu0 0
    %362 = vmatpush1.bf16.msra.mxu0 0
    %363 = vmatprep.subr.bf16.mxu0 0
    %364 = vmatpush1.bf16.msra.mxu0 0
    %365 = vmatprep.subr.bf16.mxu0 0
    %366 = vmatpush1.bf16.msra.mxu0 0
    %367 = vmatprep.subr.bf16.mxu0 0
    %368 = vmatpush1.bf16.msra.mxu0 0
    %369 = vmatprep.subr.bf16.mxu0 0
    %370 = vmatpush1.bf16.msra.mxu0 0
    %371 = vmatprep.subr.bf16.mxu0 0
    %372 = vmatpush1.bf16.msra.mxu0 %v312
    %373 = vmatprep.subr.bf16.mxu0 0
    %374 = vmatpush2.bf16.msra.mxu0 0
    %375 = vmatprep.subr.bf16.mxu0 0
    %376 = vmatpush2.bf16.msra.mxu0 0
    %377 = vmatprep.subr.bf16.mxu0 0
    %378 = vmatpush2.bf16.msra.mxu0 0
    %379 = vmatprep.subr.bf16.mxu0 0
    %380 = vmatpush2.bf16.msra.mxu0 0
    %381 = vmatprep.subr.bf16.mxu0 0
    %382 = vmatpush2.bf16.msra.mxu0 0
    %383 = vmatprep.subr.bf16.mxu0 0
    %384 = vmatpush2.bf16.msra.mxu0 0
    %385 = vmatprep.subr.bf16.mxu0 0
    %386 = vmatpush2.bf16.msra.mxu0 0
    %387 = vmatprep.subr.bf16.mxu0 0
    %388 = vmatpush2.bf16.msra.mxu0 0
    %389 = vmatprep.mubr.bf16.mxu0 0
    %390 = vmatmul.mubr.bf16.gmra.mxu0 %v355
    %v391 = vpop.f32.mrf.mxu0
    %v392 = vadd.f32 %v349, %v391
    %v393 = vpop.f32.mrf.mxu0
    %v394 = vpop.f32.mrf.mxu0
    %v395 = vpop.f32.mrf.mxu0
    %396 = vdwg.mxu0
    %v397 = vpack.c.bf16 %v301, %v301
    %v398 = vunpack.c.l.bf16 %v397
    %v399 = vsub.f32 %v301, %v398
    %v400 = vpack.c.bf16 %v399, %v399
    %v402 = vsel %vm306, %v400, 0
    %404 = vmatprep.subr.bf16.mxu0 0
    %405 = vmatpush1.bf16.msra.mxu0 0
    %406 = vmatprep.subr.bf16.mxu0 0
    %407 = vmatpush1.bf16.msra.mxu0 0
    %408 = vmatprep.subr.bf16.mxu0 0
    %409 = vmatpush1.bf16.msra.mxu0 0
    %410 = vmatprep.subr.bf16.mxu0 0
    %411 = vmatpush1.bf16.msra.mxu0 0
    %412 = vmatprep.subr.bf16.mxu0 0
    %413 = vmatpush1.bf16.msra.mxu0 0
    %414 = vmatprep.subr.bf16.mxu0 0
    %415 = vmatpush1.bf16.msra.mxu0 0
    %416 = vmatprep.subr.bf16.mxu0 0
    %417 = vmatpush1.bf16.msra.mxu0 0
    %418 = vmatprep.subr.bf16.mxu0 0
    %419 = vmatpush1.bf16.msra.mxu0 %v312
    %420 = vmatprep.subr.bf16.mxu0 0
    %421 = vmatpush2.bf16.msra.mxu0 0
    %422 = vmatprep.subr.bf16.mxu0 0
    %423 = vmatpush2.bf16.msra.mxu0 0
    %424 = vmatprep.subr.bf16.mxu0 0
    %425 = vmatpush2.bf16.msra.mxu0 0
    %426 = vmatprep.subr.bf16.mxu0 0
    %427 = vmatpush2.bf16.msra.mxu0 0
    %428 = vmatprep.subr.bf16.mxu0 0
    %429 = vmatpush2.bf16.msra.mxu0 0
    %430 = vmatprep.subr.bf16.mxu0 0
    %431 = vmatpush2.bf16.msra.mxu0 0
    %432 = vmatprep.subr.bf16.mxu0 0
    %433 = vmatpush2.bf16.msra.mxu0 0
    %434 = vmatprep.subr.bf16.mxu0 0
    %435 = vmatpush2.bf16.msra.mxu0 0
    %436 = vmatprep.mubr.bf16.mxu0 0
    %437 = vmatmul.mubr.bf16.gmra.mxu0 %v402
    %v438 = vpop.f32.mrf.mxu0
    %v439 = vadd.f32 0.0, %v438
    %v440 = vpop.f32.mrf.mxu0
    %v441 = vpop.f32.mrf.mxu0
    %v442 = vpop.f32.mrf.mxu0
    %443 = vdwg.mxu0
    %v445 = vsel %vm306, %v397, 0
    %447 = vmatprep.subr.bf16.mxu0 0
    %448 = vmatpush1.bf16.msra.mxu0 0
    %449 = vmatprep.subr.bf16.mxu0 0
    %450 = vmatpush1.bf16.msra.mxu0 0
    %451 = vmatprep.subr.bf16.mxu0 0
    %452 = vmatpush1.bf16.msra.mxu0 0
    %453 = vmatprep.subr.bf16.mxu0 0
    %454 = vmatpush1.bf16.msra.mxu0 0
    %455 = vmatprep.subr.bf16.mxu0 0
    %456 = vmatpush1.bf16.msra.mxu0 0
    %457 = vmatprep.subr.bf16.mxu0 0
    %458 = vmatpush1.bf16.msra.mxu0 0
    %459 = vmatprep.subr.bf16.mxu0 0
    %460 = vmatpush1.bf16.msra.mxu0 0
    %461 = vmatprep.subr.bf16.mxu0 0
    %462 = vmatpush1.bf16.msra.mxu0 %v312
    %463 = vmatprep.subr.bf16.mxu0 0
    %464 = vmatpush2.bf16.msra.mxu0 0
    %465 = vmatprep.subr.bf16.mxu0 0
    %466 = vmatpush2.bf16.msra.mxu0 0
    %467 = vmatprep.subr.bf16.mxu0 0
    %468 = vmatpush2.bf16.msra.mxu0 0
    %469 = vmatprep.subr.bf16.mxu0 0
    %470 = vmatpush2.bf16.msra.mxu0 0
    %471 = vmatprep.subr.bf16.mxu0 0
    %472 = vmatpush2.bf16.msra.mxu0 0
    %473 = vmatprep.subr.bf16.mxu0 0
    %474 = vmatpush2.bf16.msra.mxu0 0
    %475 = vmatprep.subr.bf16.mxu0 0
    %476 = vmatpush2.bf16.msra.mxu0 0
    %477 = vmatprep.subr.bf16.mxu0 0
    %478 = vmatpush2.bf16.msra.mxu0 0
    %479 = vmatprep.mubr.bf16.mxu0 0
    %480 = vmatmul.mubr.bf16.gmra.mxu0 %v445
    %v481 = vpop.f32.mrf.mxu0
    %v482 = vadd.f32 %v439, %v481
    %v483 = vpop.f32.mrf.mxu0
    %v484 = vpop.f32.mrf.mxu0
    %v485 = vpop.f32.mrf.mxu0
    %486 = vdwg.mxu0
    %v487 = vsub.f32 %v22, %v392
    %v488 = vmul.f32 %v487, %v487
    %v489 = vmul.f32 %v488, %v482
    %v490 = vadd.f32 %v489, 0.5
    %v491 = vxor.u32 %v490, 2147483648
    %v492 = vmul.f32 %v491, 1.442695
    %v493 = vpow.pop %v492
    %v494 = vadd.f32 %v493, 1.0
    %v495 = vrcp.pop %v494
    %v496 = vmul.f32 1.0, %v495
    %v497 = vmul.f32 %v22, %v496
    %498 = vst [vmem:[#allocation5] sm:$0xff] %v497
    // Predicated region
    $region10: #{tpu_custom_call.1} parent=1 // pred_check
      _
    $region11: #{tpu_custom_call.1} parent=1 // pred_check_branch
      %500 = sbr.rel (0) target = $region13
    $region12: #{tpu_custom_call.1} parent=1 // pred_region
      %s502 = ssub.s32 128, 128
      %503 = vsyncadd [#allocation4], %s502
      %s505 = sshll.u32 [#allocation5], 4
      %s506 = int_to_ptr.vmem [resolvable:$true] %s505
      %508 = dma.vmem_to_hbm [thread:$0]  %s506, 128, %s1, [#allocation4]
    $region13: #{tpu_custom_call.1} parent=1 // pred_fallthru
      _
    // Predicated region
    $region14: #{tpu_custom_call.1} parent=1 // pred_check
      _
    $region15: #{tpu_custom_call.1} parent=1 // pred_check_branch
      %510 = sbr.rel (0) target = $region17
    $region16: #{tpu_custom_call.1} parent=1 // pred_region
      %511 = dma.done [#allocation4], 128
    $region17: #{tpu_custom_call.1} parent=1 // pred_fallthru
      _
    %512 = vsyncpa [#allocation3], 1
    %513 = vsyncpa [#allocation4], 1

</llo_original>
